<compile_context>
chip_gen: v7x
topology: tpu7x:2x2x1
jax: 0.10.0
libtpu: 0.0.40
codegen_flags: <defaults>
</compile_context>

<pallas_src>
import functools
import math

import jax
import jax.numpy as jnp
from jax.experimental import pallas as pl
from jax.experimental.pallas import tpu as pltpu

HIDDEN_LAYER = 64
IN_FEATURES = 4
OUT_FEATURES = 2

# Large batch tile to amortize per-grid-step overhead; per-step footprint at
# tb=8192 is only a few MB of (64, tb) f32 intermediates + ~0.2 MB of I/O.
DEFAULT_TB = 8192


def _round_up(n, m):
    return -(-n // m) * m


def _pick_tb(batch, tb):
    """Lane-aligned batch tile (multiple of 128); >=2 grid steps when possible."""
    if tb is not None:
        return tb
    padded = _round_up(batch, 128)
    tb = min(DEFAULT_TB, padded)
    # Single-step grid would idle the second TensorCore on v7x; split if we can.
    if tb == padded and padded >= 256:
        tb = _round_up(pl.cdiv(padded, 2), 128)
    return tb


def dqn_kernel(x_ref,
               w1_ref, b1_ref,
               w2_ref, b2_ref,
               w3_ref, b3_ref,
               w4_ref, b4_ref,
               o_ref):
    # x: (4, tb) -- batch on the lane axis, features on sublanes.
    x = x_ref[...]

    # Layer 1: (64, 4) @ (4, tb) -> (64, tb). K=4 is tiny; MXU has slack.
    h = jnp.dot(w1_ref[...], x, preferred_element_type=jnp.float32) + b1_ref[...]
    h = jnp.maximum(h, 0.0)

    # Layers 2 & 3: (64, 64) @ (64, tb) on the MXU, f32 accumulation.
    h = jnp.dot(w2_ref[...], h, preferred_element_type=jnp.float32) + b2_ref[...]
    h = jnp.maximum(h, 0.0)
    h = jnp.dot(w3_ref[...], h, preferred_element_type=jnp.float32) + b3_ref[...]
    h = jnp.maximum(h, 0.0)

    # Layer 4: (2, 64) @ (64, tb) -> (2, tb); single lane-dense full-block store.
    o = jnp.dot(w4_ref[...], h, preferred_element_type=jnp.float32) + b4_ref[...]
    o_ref[...] = o.astype(o_ref.dtype)


@functools.partial(jax.jit, static_argnames=("tb",))
def dqn_forward(x, params, *, tb=None):
    """x: [B, 4] float32.  params: w1..w4 in PyTorch (out, in) layout, b* as (out, 1)."""
    B = x.shape[0]
    tb = _pick_tb(B, tb)
    grid = (pl.cdiv(B, tb),)

    x_t = x.T  # (4, B): batch on the lane axis for the kernel.

    const = lambda i: (0, 0)  # weights/biases: fetched once, VMEM-resident
    in_specs = [
        pl.BlockSpec((IN_FEATURES, tb), lambda i: (0, i)),              # x (4, tb)
        pl.BlockSpec((HIDDEN_LAYER, IN_FEATURES), const),               # w1 (64, 4)
        pl.BlockSpec((HIDDEN_LAYER, 1), const),                         # b1 (64, 1)
        pl.BlockSpec((HIDDEN_LAYER, HIDDEN_LAYER), const),              # w2
        pl.BlockSpec((HIDDEN_LAYER, 1), const),                         # b2
        pl.BlockSpec((HIDDEN_LAYER, HIDDEN_LAYER), const),              # w3
        pl.BlockSpec((HIDDEN_LAYER, 1), const),                         # b3
        pl.BlockSpec((OUT_FEATURES, HIDDEN_LAYER), const),              # w4 (2, 64)
        pl.BlockSpec((OUT_FEATURES, 1), const),                         # b4 (2, 1)
    ]
    out_spec = pl.BlockSpec((OUT_FEATURES, tb), lambda i: (0, i))       # (2, tb)

    flops = 2 * B * (IN_FEATURES * HIDDEN_LAYER
                     + HIDDEN_LAYER * HIDDEN_LAYER
                     + HIDDEN_LAYER * HIDDEN_LAYER
                     + HIDDEN_LAYER * OUT_FEATURES)
    weight_bytes = 4 * (IN_FEATURES * HIDDEN_LAYER
                        + 2 * HIDDEN_LAYER * HIDDEN_LAYER
                        + HIDDEN_LAYER * OUT_FEATURES
                        + 3 * HIDDEN_LAYER + OUT_FEATURES)
    bytes_accessed = B * 4 * (IN_FEATURES + OUT_FEATURES) + weight_bytes

    out_t = pl.pallas_call(
        dqn_kernel,
        out_shape=jax.ShapeDtypeStruct((OUT_FEATURES, B), jnp.float32),
        grid=grid,
        in_specs=in_specs,
        out_specs=out_spec,
        compiler_params=pltpu.CompilerParams(
            dimension_semantics=("parallel",),      # megacore sharding on v7x
            vmem_limit_bytes=32 * 1024 * 1024,      # needed on v5e, safe on v7x
        ),
        cost_estimate=pl.CostEstimate(
            flops=flops, transcendentals=0, bytes_accessed=bytes_accessed),
    )(x_t,
      params["w1"], params["b1"],
      params["w2"], params["b2"],
      params["w3"], params["b3"],
      params["w4"], params["b4"])

    return out_t.T  # (B, 2), matching the PyTorch forward


def init_params(key):
    """Deterministic init matching torch.nn.Linear default: U(-1/sqrt(fan_in), .).

    Weights are stored in PyTorch (out, in) layout; biases as (out, 1) columns.
    """
    dims = [(HIDDEN_LAYER, IN_FEATURES),
            (HIDDEN_LAYER, HIDDEN_LAYER),
            (HIDDEN_LAYER, HIDDEN_LAYER),
            (OUT_FEATURES, HIDDEN_LAYER)]
    params = {}
    keys = jax.random.split(key, 2 * len(dims))
    for i, (fan_out, fan_in) in enumerate(dims):
        bound = 1.0 / math.sqrt(fan_in)
        params[f"w{i + 1}"] = jax.random.uniform(
            keys[2 * i], (fan_out, fan_in), minval=-bound, maxval=bound,
            dtype=jnp.float32)
        params[f"b{i + 1}"] = jax.random.uniform(
            keys[2 * i + 1], (fan_out, 1), minval=-bound, maxval=bound,
            dtype=jnp.float32)
    return params


def reference_forward(x, params):
    h = jnp.maximum(x @ params["w1"].T + params["b1"].T, 0.0)
    h = jnp.maximum(h @ params["w2"].T + params["b2"].T, 0.0)
    h = jnp.maximum(h @ params["w3"].T + params["b3"].T, 0.0)
    return h @ params["w4"].T + params["b4"].T


if __name__ == "__main__":
    key = jax.random.PRNGKey(0)
    pkey, xkey, xkey2 = jax.random.split(key, 3)
    params = init_params(pkey)

    # Small demo batch (single grid step, partial lane tile).
    batch = 8
    x = jax.random.normal(xkey, (batch, IN_FEATURES), dtype=jnp.float32)
    out = jax.block_until_ready(dqn_forward(x, params))
    ref = reference_forward(x, params)
    assert out.shape == (batch, OUT_FEATURES)
    assert jnp.allclose(out, ref, atol=1e-4, rtol=1e-4)

    # Multi-step grid with a partial final tile (exercises masked writeback).
    batch2 = 200
    x2 = jax.random.normal(xkey2, (batch2, IN_FEATURES), dtype=jnp.float32)
    out2 = jax.block_until_ready(dqn_forward(x2, params, tb=128))
    ref2 = reference_forward(x2, params)
    assert out2.shape == (batch2, OUT_FEATURES)
    assert jnp.allclose(out2, ref2, atol=1e-4, rtol=1e-4)

    print("KERNEL_OK")
</pallas_src>

<mosaic_0001>
module attributes {stable_mosaic.version = 11 : i64} {
  func.func @dqn_kernel(%arg0: i32, %arg1: memref<4x128xf32, #tpu.memory_space<vmem>>, %arg2: memref<64x4xf32, #tpu.memory_space<vmem>>, %arg3: memref<64x1xf32, #tpu.memory_space<vmem>>, %arg4: memref<64x64xf32, #tpu.memory_space<vmem>>, %arg5: memref<64x1xf32, #tpu.memory_space<vmem>>, %arg6: memref<64x64xf32, #tpu.memory_space<vmem>>, %arg7: memref<64x1xf32, #tpu.memory_space<vmem>>, %arg8: memref<2x64xf32, #tpu.memory_space<vmem>>, %arg9: memref<2x1xf32, #tpu.memory_space<vmem>>, %arg10: memref<2x128xf32, #tpu.memory_space<vmem>>) attributes {dimension_semantics = [#tpu.dimension_semantics<parallel>], iteration_bounds = array<i64: 1>, scalar_prefetch = 0 : i64, scratch_operands = 0 : i64, tpu.core_type = #tpu.core_type<tc>, window_params = [{transform_indices = @transform_0, window_bounds = array<i64: 4, 128>}, {pipeline_mode = #tpu.pipeline_mode<synchronous>, transform_indices = @transform_1, window_bounds = array<i64: 64, 4>}, {pipeline_mode = #tpu.pipeline_mode<synchronous>, transform_indices = @transform_2, window_bounds = array<i64: 64, 1>}, {pipeline_mode = #tpu.pipeline_mode<synchronous>, transform_indices = @transform_3, window_bounds = array<i64: 64, 64>}, {pipeline_mode = #tpu.pipeline_mode<synchronous>, transform_indices = @transform_4, window_bounds = array<i64: 64, 1>}, {pipeline_mode = #tpu.pipeline_mode<synchronous>, transform_indices = @transform_5, window_bounds = array<i64: 64, 64>}, {pipeline_mode = #tpu.pipeline_mode<synchronous>, transform_indices = @transform_6, window_bounds = array<i64: 64, 1>}, {pipeline_mode = #tpu.pipeline_mode<synchronous>, transform_indices = @transform_7, window_bounds = array<i64: 2, 64>}, {pipeline_mode = #tpu.pipeline_mode<synchronous>, transform_indices = @transform_8, window_bounds = array<i64: 2, 1>}, {transform_indices = @transform_9, window_bounds = array<i64: 2, 128>}]} {
    %c0 = arith.constant 0 : index
    %c0_0 = arith.constant 0 : index
    %0 = vector.load %arg1[%c0, %c0_0] : memref<4x128xf32, #tpu.memory_space<vmem>>, vector<4x128xf32>
    %c0_1 = arith.constant 0 : index
    %c0_2 = arith.constant 0 : index
    %1 = vector.load %arg2[%c0_1, %c0_2] : memref<64x4xf32, #tpu.memory_space<vmem>>, vector<64x4xf32>
    %cst = arith.constant dense<0.000000e+00> : vector<64x128xf32>
    %2 = tpu.matmul %1, %0, %cst {dimension_numbers = #tpu.dot_dimension_numbers<[1], [0], [0], [1], [0, 0, 1, 1], [], []>} : vector<64x4xf32>, vector<4x128xf32>, vector<64x128xf32> -> vector<64x128xf32>
    %c0_3 = arith.constant 0 : index
    %c0_4 = arith.constant 0 : index
    %3 = vector.load %arg3[%c0_3, %c0_4] : memref<64x1xf32, #tpu.memory_space<vmem>>, vector<64x1xf32>
    %4 = vector.broadcast %3 : vector<64x1xf32> to vector<64x128xf32>
    %5 = arith.addf %2, %4 : vector<64x128xf32>
    %cst_5 = arith.constant 0.000000e+00 : f32
    %6 = vector.broadcast %cst_5 : f32 to vector<64x128xf32>
    %7 = arith.maximumf %5, %6 : vector<64x128xf32>
    %c0_6 = arith.constant 0 : index
    %c0_7 = arith.constant 0 : index
    %8 = vector.load %arg4[%c0_6, %c0_7] : memref<64x64xf32, #tpu.memory_space<vmem>>, vector<64x64xf32>
    %cst_8 = arith.constant dense<0.000000e+00> : vector<64x128xf32>
    %9 = tpu.matmul %8, %7, %cst_8 {dimension_numbers = #tpu.dot_dimension_numbers<[1], [0], [0], [1], [0, 0, 1, 1], [], []>} : vector<64x64xf32>, vector<64x128xf32>, vector<64x128xf32> -> vector<64x128xf32>
    %c0_9 = arith.constant 0 : index
    %c0_10 = arith.constant 0 : index
    %10 = vector.load %arg5[%c0_9, %c0_10] : memref<64x1xf32, #tpu.memory_space<vmem>>, vector<64x1xf32>
    %11 = vector.broadcast %10 : vector<64x1xf32> to vector<64x128xf32>
    %12 = arith.addf %9, %11 : vector<64x128xf32>
    %cst_11 = arith.constant 0.000000e+00 : f32
    %13 = vector.broadcast %cst_11 : f32 to vector<64x128xf32>
    %14 = arith.maximumf %12, %13 : vector<64x128xf32>
    %c0_12 = arith.constant 0 : index
    %c0_13 = arith.constant 0 : index
    %15 = vector.load %arg6[%c0_12, %c0_13] : memref<64x64xf32, #tpu.memory_space<vmem>>, vector<64x64xf32>
    %cst_14 = arith.constant dense<0.000000e+00> : vector<64x128xf32>
    %16 = tpu.matmul %15, %14, %cst_14 {dimension_numbers = #tpu.dot_dimension_numbers<[1], [0], [0], [1], [0, 0, 1, 1], [], []>} : vector<64x64xf32>, vector<64x128xf32>, vector<64x128xf32> -> vector<64x128xf32>
    %c0_15 = arith.constant 0 : index
    %c0_16 = arith.constant 0 : index
    %17 = vector.load %arg7[%c0_15, %c0_16] : memref<64x1xf32, #tpu.memory_space<vmem>>, vector<64x1xf32>
    %18 = vector.broadcast %17 : vector<64x1xf32> to vector<64x128xf32>
    %19 = arith.addf %16, %18 : vector<64x128xf32>
    %cst_17 = arith.constant 0.000000e+00 : f32
    %20 = vector.broadcast %cst_17 : f32 to vector<64x128xf32>
    %21 = arith.maximumf %19, %20 : vector<64x128xf32>
    %c0_18 = arith.constant 0 : index
    %c0_19 = arith.constant 0 : index
    %22 = vector.load %arg8[%c0_18, %c0_19] : memref<2x64xf32, #tpu.memory_space<vmem>>, vector<2x64xf32>
    %cst_20 = arith.constant dense<0.000000e+00> : vector<2x128xf32>
    %23 = tpu.matmul %22, %21, %cst_20 {dimension_numbers = #tpu.dot_dimension_numbers<[1], [0], [0], [1], [0, 0, 1, 1], [], []>} : vector<2x64xf32>, vector<64x128xf32>, vector<2x128xf32> -> vector<2x128xf32>
    %c0_21 = arith.constant 0 : index
    %c0_22 = arith.constant 0 : index
    %24 = vector.load %arg9[%c0_21, %c0_22] : memref<2x1xf32, #tpu.memory_space<vmem>>, vector<2x1xf32>
    %25 = vector.broadcast %24 : vector<2x1xf32> to vector<2x128xf32>
    %26 = arith.addf %23, %25 : vector<2x128xf32>
    %c0_23 = arith.constant 0 : index
    %c0_24 = arith.constant 0 : index
    %27 = vector.load %arg10[%c0_23, %c0_24] : memref<2x128xf32, #tpu.memory_space<vmem>>, vector<2x128xf32>
    tpu.vector_store %arg10[%c0_23, %c0_24], %26 {strides = array<i32>} : memref<2x128xf32, #tpu.memory_space<vmem>>, vector<2x128xf32>,
    return
  }
  func.func @transform_0(%arg0: i32) -> (i32, i32) {
    %c0_i32 = arith.constant 0 : i32
    %c0_i32_0 = arith.constant 0 : i32
    return %c0_i32, %arg0 : i32, i32
  }
  func.func @transform_1(%arg0: i32) -> (i32, i32) {
    %c0_i32 = arith.constant 0 : i32
    %c0_i32_0 = arith.constant 0 : i32
    %c0_i32_1 = arith.constant 0 : i32
    return %c0_i32, %c0_i32_0 : i32, i32
  }
  func.func @transform_2(%arg0: i32) -> (i32, i32) {
    %c0_i32 = arith.constant 0 : i32
    %c0_i32_0 = arith.constant 0 : i32
    %c0_i32_1 = arith.constant 0 : i32
    return %c0_i32, %c0_i32_0 : i32, i32
  }
  func.func @transform_3(%arg0: i32) -> (i32, i32) {
    %c0_i32 = arith.constant 0 : i32
    %c0_i32_0 = arith.constant 0 : i32
    %c0_i32_1 = arith.constant 0 : i32
    return %c0_i32, %c0_i32_0 : i32, i32
  }
  func.func @transform_4(%arg0: i32) -> (i32, i32) {
    %c0_i32 = arith.constant 0 : i32
    %c0_i32_0 = arith.constant 0 : i32
    %c0_i32_1 = arith.constant 0 : i32
    return %c0_i32, %c0_i32_0 : i32, i32
  }
  func.func @transform_5(%arg0: i32) -> (i32, i32) {
    %c0_i32 = arith.constant 0 : i32
    %c0_i32_0 = arith.constant 0 : i32
    %c0_i32_1 = arith.constant 0 : i32
    return %c0_i32, %c0_i32_0 : i32, i32
  }
  func.func @transform_6(%arg0: i32) -> (i32, i32) {
    %c0_i32 = arith.constant 0 : i32
    %c0_i32_0 = arith.constant 0 : i32
    %c0_i32_1 = arith.constant 0 : i32
    return %c0_i32, %c0_i32_0 : i32, i32
  }
  func.func @transform_7(%arg0: i32) -> (i32, i32) {
    %c0_i32 = arith.constant 0 : i32
    %c0_i32_0 = arith.constant 0 : i32
    %c0_i32_1 = arith.constant 0 : i32
    return %c0_i32, %c0_i32_0 : i32, i32
  }
  func.func @transform_8(%arg0: i32) -> (i32, i32) {
    %c0_i32 = arith.constant 0 : i32
    %c0_i32_0 = arith.constant 0 : i32
    %c0_i32_1 = arith.constant 0 : i32
    return %c0_i32, %c0_i32_0 : i32, i32
  }
  func.func @transform_9(%arg0: i32) -> (i32, i32) {
    %c0_i32 = arith.constant 0 : i32
    %c0_i32_0 = arith.constant 0 : i32
    return %c0_i32, %arg0 : i32, i32
  }
}

</mosaic_0001>

<llo_original>
// kernel: dqn_forward.1
$region0: #{dqn_forward.1}
  #allocation0 [shape = 'u32[]', space=smem, size = 0x4, offset = 0x4, fixed_abs, tag = 'smem constant byte address 0x4 - core index']
  #allocation1 [shape = 'u32[144,128]{1,0:T(1,128)}', space=vmem, size = 0x12000, scoped, tag = 'internal scratch']
  %s0 = inlined_call_operand.vmem [shape: f32[4,8], index: 0, kind: input, shape index: {}]
  %s1 = inlined_call_operand.vmem [shape: f32[64,4], index: 1, kind: input, shape index: {}]
  %s2 = inlined_call_operand.vmem [shape: f32[64,1], index: 2, kind: input, shape index: {}]
  %s3 = inlined_call_operand.vmem [shape: f32[64,64], index: 3, kind: input, shape index: {}]
  %s4 = inlined_call_operand.vmem [shape: f32[64,1], index: 4, kind: input, shape index: {}]
  %s5 = inlined_call_operand.vmem [shape: f32[64,64], index: 5, kind: input, shape index: {}]
  %s6 = inlined_call_operand.vmem [shape: f32[64,1], index: 6, kind: input, shape index: {}]
  %s7 = inlined_call_operand.vmem [shape: f32[2,64], index: 7, kind: input, shape index: {}]
  %s8 = inlined_call_operand.vmem [shape: f32[2,1], index: 8, kind: input, shape index: {}]
  %s9 = inlined_call_operand.hbm [shape: f32[2,8], index: 9, kind: output, shape index: {}]
  %s10 = sld [smem:[#allocation0]]
  $region46: #{dqn_forward.1} parent=0
    _
  %s12 = ssub.s32 1, %s10
  %s13 = scalar_select 0, %s12, %s10
  $region1: #{dqn_forward.1} parent=0
    #allocation2 [shape = 'u8[1024]{0}', space=vmem, size = 0x400, scoped, tag = 'output window, operand 0, single buffered']
    #allocation3 [shape = 's32[1]{0}', space=sflag, size = 0x4, scoped, tag = 'scoped memory for dqn_forward.1']
    %14 = vsyncpa [#allocation3], 0
    // Predicated region
    $region2: #{dqn_forward.1} parent=1 // pred_check
      _
    $region3: #{dqn_forward.1} parent=1 // pred_check_branch
      %16 = sbr.rel (0) target = $region5
    $region4: #{dqn_forward.1} parent=1 // pred_region
      _
    $region5: #{dqn_forward.1} parent=1 // pred_fallthru
      _
    // Predicated region
    $region6: #{dqn_forward.1} parent=1 // pred_check
      _
    $region7: #{dqn_forward.1} parent=1 // pred_check_branch
      %18 = sbr.rel (0) target = $region9
    $region8: #{dqn_forward.1} parent=1 // pred_region
      _
    $region9: #{dqn_forward.1} parent=1 // pred_fallthru
      _
    // Predicated region
    $region10: #{dqn_forward.1} parent=1 // pred_check
      _
    $region11: #{dqn_forward.1} parent=1 // pred_check_branch
      %20 = sbr.rel (0) target = $region13
    $region12: #{dqn_forward.1} parent=1 // pred_region
      _
    $region13: #{dqn_forward.1} parent=1 // pred_fallthru
      _
    // Predicated region
    $region14: #{dqn_forward.1} parent=1 // pred_check
      _
    $region15: #{dqn_forward.1} parent=1 // pred_check_branch
      %22 = sbr.rel (0) target = $region17
    $region16: #{dqn_forward.1} parent=1 // pred_region
      _
    $region17: #{dqn_forward.1} parent=1 // pred_fallthru
      _
    // Predicated region
    $region18: #{dqn_forward.1} parent=1 // pred_check
      _
    $region19: #{dqn_forward.1} parent=1 // pred_check_branch
      %24 = sbr.rel (0) target = $region21
    $region20: #{dqn_forward.1} parent=1 // pred_region
      _
    $region21: #{dqn_forward.1} parent=1 // pred_fallthru
      _
    // Predicated region
    $region22: #{dqn_forward.1} parent=1 // pred_check
      _
    $region23: #{dqn_forward.1} parent=1 // pred_check_branch
      %26 = sbr.rel (0) target = $region25
    $region24: #{dqn_forward.1} parent=1 // pred_region
      _
    $region25: #{dqn_forward.1} parent=1 // pred_fallthru
      _
    // Predicated region
    $region26: #{dqn_forward.1} parent=1 // pred_check
      _
    $region27: #{dqn_forward.1} parent=1 // pred_check_branch
      %28 = sbr.rel (0) target = $region29
    $region28: #{dqn_forward.1} parent=1 // pred_region
      _
    $region29: #{dqn_forward.1} parent=1 // pred_fallthru
      _
    // Predicated region
    $region30: #{dqn_forward.1} parent=1 // pred_check
      _
    $region31: #{dqn_forward.1} parent=1 // pred_check_branch
      %30 = sbr.rel (0) target = $region33
    $region32: #{dqn_forward.1} parent=1 // pred_region
      _
    $region33: #{dqn_forward.1} parent=1 // pred_fallthru
      _
    // Predicated region
    $region34: #{dqn_forward.1} parent=1 // pred_check
      _
    $region35: #{dqn_forward.1} parent=1 // pred_check_branch
      %32 = sbr.rel (0) target = $region37
    $region36: #{dqn_forward.1} parent=1 // pred_region
      _
    $region37: #{dqn_forward.1} parent=1 // pred_fallthru
      _
    %v33 = vld [vmem:[%s0] sm:$0xf]
    %v34 = vld [vmem:[%s1] sm:$0xff]
    %v35 = vld [vmem:[%s1 + $0x8] sm:$0xff]
    %v36 = vld [vmem:[%s1 + $0x10] sm:$0xff]
    %v37 = vld [vmem:[%s1 + $0x18] sm:$0xff]
    %v38 = vld [vmem:[%s1 + $0x20] sm:$0xff]
    %v39 = vld [vmem:[%s1 + $0x28] sm:$0xff]
    %v40 = vld [vmem:[%s1 + $0x30] sm:$0xff]
    %v41 = vld [vmem:[%s1 + $0x38] sm:$0xff]
    %v42 = vld [vmem:[%s2] sm:$0xff]
    %v43 = vld [vmem:[%s2 + $0x8] sm:$0xff]
    %v44 = vld [vmem:[%s2 + $0x10] sm:$0xff]
    %v45 = vld [vmem:[%s2 + $0x18] sm:$0xff]
    %v46 = vld [vmem:[%s2 + $0x20] sm:$0xff]
    %v47 = vld [vmem:[%s2 + $0x28] sm:$0xff]
    %v48 = vld [vmem:[%s2 + $0x30] sm:$0xff]
    %v49 = vld [vmem:[%s2 + $0x38] sm:$0xff]
    %51 = vset.pattern.permute.xlu0 0
    %52 = vperm.xlu0 %51, %v42
    %v53 = vpop.permute.xlu0 %52
    %56 = vset.pattern.permute.xlu0 0
    %57 = vperm.xlu0 %56, %v43
    %v58 = vpop.permute.xlu0 %57
    %61 = vset.pattern.permute.xlu0 0
    %62 = vperm.xlu0 %61, %v44
    %v63 = vpop.permute.xlu0 %62
    %66 = vset.pattern.permute.xlu0 0
    %67 = vperm.xlu0 %66, %v45
    %v68 = vpop.permute.xlu0 %67
    %71 = vset.pattern.permute.xlu0 0
    %72 = vperm.xlu0 %71, %v46
    %v73 = vpop.permute.xlu0 %72
    %76 = vset.pattern.permute.xlu0 0
    %77 = vperm.xlu0 %76, %v47
    %v78 = vpop.permute.xlu0 %77
    %81 = vset.pattern.permute.xlu0 0
    %82 = vperm.xlu0 %81, %v48
    %v83 = vpop.permute.xlu0 %82
    %86 = vset.pattern.permute.xlu0 0
    %87 = vperm.xlu0 %86, %v49
    %v88 = vpop.permute.xlu0 %87
    %vm90 = vcmask 31744
    %v92 = vsel %vm90, %v34, 0
    %v95 = vsel %vm90, %v35, 0
    %v98 = vsel %vm90, %v36, 0
    %v101 = vsel %vm90, %v37, 0
    %v104 = vsel %vm90, %v38, 0
    %v107 = vsel %vm90, %v39, 0
    %v110 = vsel %vm90, %v40, 0
    %v113 = vsel %vm90, %v41, 0
    %vm115 = vcmask 1043456
    %v117 = vsel %vm115, %v33, 0
    %119 = vmatprep.subr.mxu0 0.0
    %120 = vmatpush1.msra.mxu0 %v117
    %121 = vmatprep.subr.mxu0 0.0
    %122 = vmatpush1.msra.mxu0 0.0
    %123 = vmatprep.subr.mxu0 0.0
    %124 = vmatpush1.msra.mxu0 0.0
    %125 = vmatprep.subr.mxu0 0.0
    %126 = vmatpush1.msra.mxu0 0.0
    %127 = vmatprep.subr.mxu0 0.0
    %128 = vmatpush1.msra.mxu0 0.0
    %129 = vmatprep.subr.mxu0 0.0
    %130 = vmatpush1.msra.mxu0 0.0
    %131 = vmatprep.subr.mxu0 0.0
    %132 = vmatpush1.msra.mxu0 0.0
    %133 = vmatprep.subr.mxu0 0.0
    %134 = vmatpush1.msra.mxu0 0.0
    %135 = vmatprep.subr.mxu0 0.0
    %136 = vmatpush1.msra.mxu0 0.0
    %137 = vmatprep.subr.mxu0 0.0
    %138 = vmatpush1.msra.mxu0 0.0
    %139 = vmatprep.subr.mxu0 0.0
    %140 = vmatpush1.msra.mxu0 0.0
    %141 = vmatprep.subr.mxu0 0.0
    %142 = vmatpush1.msra.mxu0 0.0
    %143 = vmatprep.subr.mxu0 0.0
    %144 = vmatpush1.msra.mxu0 0.0
    %145 = vmatprep.subr.mxu0 0.0
    %146 = vmatpush1.msra.mxu0 0.0
    %147 = vmatprep.subr.mxu0 0.0
    %148 = vmatpush1.msra.mxu0 0.0
    %149 = vmatprep.subr.mxu0 0.0
    %150 = vmatpush1.msra.mxu0 0.0
    %151 = vmatprep.subr.mxu0 0.0
    %152 = vmatpush1.msra.mxu0 0.0
    %153 = vmatprep.subr.mxu0 0.0
    %154 = vmatpush1.msra.mxu0 0.0
    %155 = vmatprep.subr.mxu0 0.0
    %156 = vmatpush1.msra.mxu0 0.0
    %157 = vmatprep.subr.mxu0 0.0
    %158 = vmatpush1.msra.mxu0 0.0
    %159 = vmatprep.subr.mxu0 0.0
    %160 = vmatpush1.msra.mxu0 0.0
    %161 = vmatprep.subr.mxu0 0.0
    %162 = vmatpush1.msra.mxu0 0.0
    %163 = vmatprep.subr.mxu0 0.0
    %164 = vmatpush1.msra.mxu0 0.0
    %165 = vmatprep.subr.mxu0 0.0
    %166 = vmatpush1.msra.mxu0 0.0
    %167 = vmatprep.subr.mxu0 0.0
    %168 = vmatpush1.msra.mxu0 0.0
    %169 = vmatprep.subr.mxu0 0.0
    %170 = vmatpush1.msra.mxu0 0.0
    %171 = vmatprep.subr.mxu0 0.0
    %172 = vmatpush1.msra.mxu0 0.0
    %173 = vmatprep.subr.mxu0 0.0
    %174 = vmatpush1.msra.mxu0 0.0
    %175 = vmatprep.subr.mxu0 0.0
    %176 = vmatpush1.msra.mxu0 0.0
    %177 = vmatprep.subr.mxu0 0.0
    %178 = vmatpush1.msra.mxu0 0.0
    %179 = vmatprep.subr.mxu0 0.0
    %180 = vmatpush1.msra.mxu0 0.0
    %181 = vmatprep.subr.mxu0 0.0
    %182 = vmatpush1.msra.mxu0 0.0
    %183 = vmatprep.mubr.f32.mxu0 0.0
    %184 = vmatmul.mubr.f32.gmra.mrb[0].mxu0 %v92
    %v185 = vpop.f32.mrb[0].mxu0
    %v186 = vadd.f32 %v53, %v185
    %v187 = vpop.f32.mrb[0].mxu0
    %188 = vmatprep.mubr.f32.mxu0 0.0
    %189 = vmatmul.mubr.f32.gmra.mrb[0].mxu0 %v95
    %v190 = vpop.f32.mrb[0].mxu0
    %v191 = vadd.f32 %v58, %v190
    %v192 = vpop.f32.mrb[0].mxu0
    %193 = vmatprep.mubr.f32.mxu0 0.0
    %194 = vmatmul.mubr.f32.gmra.mrb[0].mxu0 %v98
    %v195 = vpop.f32.mrb[0].mxu0
    %v196 = vadd.f32 %v63, %v195
    %v197 = vpop.f32.mrb[0].mxu0
    %198 = vmatprep.mubr.f32.mxu0 0.0
    %199 = vmatmul.mubr.f32.gmra.mrb[0].mxu0 %v101
    %v200 = vpop.f32.mrb[0].mxu0
    %v201 = vadd.f32 %v68, %v200
    %v202 = vpop.f32.mrb[0].mxu0
    %203 = vmatprep.mubr.f32.mxu0 0.0
    %204 = vmatmul.mubr.f32.gmra.mrb[0].mxu0 %v104
    %v205 = vpop.f32.mrb[0].mxu0
    %v206 = vadd.f32 %v73, %v205
    %v207 = vpop.f32.mrb[0].mxu0
    %208 = vmatprep.mubr.f32.mxu0 0.0
    %209 = vmatmul.mubr.f32.gmra.mrb[0].mxu0 %v107
    %v210 = vpop.f32.mrb[0].mxu0
    %v211 = vadd.f32 %v78, %v210
    %v212 = vpop.f32.mrb[0].mxu0
    %213 = vmatprep.mubr.f32.mxu0 0.0
    %214 = vmatmul.mubr.f32.gmra.mrb[0].mxu0 %v110
    %v215 = vpop.f32.mrb[0].mxu0
    %v216 = vadd.f32 %v83, %v215
    %v217 = vpop.f32.mrb[0].mxu0
    %218 = vmatprep.mubr.f32.mxu0 0.0
    %219 = vmatmul.mubr.f32.gmra.mrb[0].mxu0 %v113
    %v220 = vpop.f32.mrb[0].mxu0
    %v221 = vadd.f32 %v88, %v220
    %v222 = vpop.f32.mrb[0].mxu0
    %223 = vdwg.mxu0
    %v224 = vmax.f32 %v186, 0.0
    %v225 = vmax.f32 %v191, 0.0
    %v226 = vmax.f32 %v196, 0.0
    %v227 = vmax.f32 %v201, 0.0
    %v228 = vmax.f32 %v206, 0.0
    %v229 = vmax.f32 %v211, 0.0
    %v230 = vmax.f32 %v216, 0.0
    %v231 = vmax.f32 %v221, 0.0
    %v232 = vld [vmem:[%s3] sm:$0xff]
    %v233 = vld [vmem:[%s3 + $0x8] sm:$0xff]
    %v234 = vld [vmem:[%s3 + $0x10] sm:$0xff]
    %v235 = vld [vmem:[%s3 + $0x18] sm:$0xff]
    %v236 = vld [vmem:[%s3 + $0x20] sm:$0xff]
    %v237 = vld [vmem:[%s3 + $0x28] sm:$0xff]
    %v238 = vld [vmem:[%s3 + $0x30] sm:$0xff]
    %v239 = vld [vmem:[%s3 + $0x38] sm:$0xff]
    %v240 = vld [vmem:[%s4] sm:$0xff]
    %v241 = vld [vmem:[%s4 + $0x8] sm:$0xff]
    %v242 = vld [vmem:[%s4 + $0x10] sm:$0xff]
    %v243 = vld [vmem:[%s4 + $0x18] sm:$0xff]
    %v244 = vld [vmem:[%s4 + $0x20] sm:$0xff]
    %v245 = vld [vmem:[%s4 + $0x28] sm:$0xff]
    %v246 = vld [vmem:[%s4 + $0x30] sm:$0xff]
    %v247 = vld [vmem:[%s4 + $0x38] sm:$0xff]
    %249 = vset.pattern.permute.xlu0 0
    %250 = vperm.xlu0 %249, %v240
    %v251 = vpop.permute.xlu0 %250
    %254 = vset.pattern.permute.xlu0 0
    %255 = vperm.xlu0 %254, %v241
    %v256 = vpop.permute.xlu0 %255
    %259 = vset.pattern.permute.xlu0 0
    %260 = vperm.xlu0 %259, %v242
    %v261 = vpop.permute.xlu0 %260
    %264 = vset.pattern.permute.xlu0 0
    %265 = vperm.xlu0 %264, %v243
    %v266 = vpop.permute.xlu0 %265
    %269 = vset.pattern.permute.xlu0 0
    %270 = vperm.xlu0 %269, %v244
    %v271 = vpop.permute.xlu0 %270
    %274 = vset.pattern.permute.xlu0 0
    %275 = vperm.xlu0 %274, %v245
    %v276 = vpop.permute.xlu0 %275
    %279 = vset.pattern.permute.xlu0 0
    %280 = vperm.xlu0 %279, %v246
    %v281 = vpop.permute.xlu0 %280
    %284 = vset.pattern.permute.xlu0 0
    %285 = vperm.xlu0 %284, %v247
    %v286 = vpop.permute.xlu0 %285
    %vm288 = vcmask 523264
    %v290 = vsel %vm288, %v232, 0
    %v293 = vsel %vm288, %v233, 0
    %v296 = vsel %vm288, %v234, 0
    %v299 = vsel %vm288, %v235, 0
    %v302 = vsel %vm288, %v236, 0
    %v305 = vsel %vm288, %v237, 0
    %v308 = vsel %vm288, %v238, 0
    %v311 = vsel %vm288, %v239, 0
    %313 = vmatprep.subr.mxu0 0.0
    %314 = vmatpush1.msra.mxu0 %v224
    %315 = vmatprep.subr.mxu0 0.0
    %316 = vmatpush1.msra.mxu0 %v225
    %317 = vmatprep.subr.mxu0 0.0
    %318 = vmatpush1.msra.mxu0 %v226
    %319 = vmatprep.subr.mxu0 0.0
    %320 = vmatpush1.msra.mxu0 %v227
    %321 = vmatprep.subr.mxu0 0.0
    %322 = vmatpush1.msra.mxu0 %v228
    %323 = vmatprep.subr.mxu0 0.0
    %324 = vmatpush1.msra.mxu0 %v229
    %325 = vmatprep.subr.mxu0 0.0
    %326 = vmatpush1.msra.mxu0 %v230
    %327 = vmatprep.subr.mxu0 0.0
    %328 = vmatpush1.msra.mxu0 %v231
    %329 = vmatprep.subr.mxu0 0.0
    %330 = vmatpush1.msra.mxu0 0.0
    %331 = vmatprep.subr.mxu0 0.0
    %332 = vmatpush1.msra.mxu0 0.0
    %333 = vmatprep.subr.mxu0 0.0
    %334 = vmatpush1.msra.mxu0 0.0
    %335 = vmatprep.subr.mxu0 0.0
    %336 = vmatpush1.msra.mxu0 0.0
    %337 = vmatprep.subr.mxu0 0.0
    %338 = vmatpush1.msra.mxu0 0.0
    %339 = vmatprep.subr.mxu0 0.0
    %340 = vmatpush1.msra.mxu0 0.0
    %341 = vmatprep.subr.mxu0 0.0
    %342 = vmatpush1.msra.mxu0 0.0
    %343 = vmatprep.subr.mxu0 0.0
    %344 = vmatpush1.msra.mxu0 0.0
    %345 = vmatprep.subr.mxu0 0.0
    %346 = vmatpush1.msra.mxu0 0.0
    %347 = vmatprep.subr.mxu0 0.0
    %348 = vmatpush1.msra.mxu0 0.0
    %349 = vmatprep.subr.mxu0 0.0
    %350 = vmatpush1.msra.mxu0 0.0
    %351 = vmatprep.subr.mxu0 0.0
    %352 = vmatpush1.msra.mxu0 0.0
    %353 = vmatprep.subr.mxu0 0.0
    %354 = vmatpush1.msra.mxu0 0.0
    %355 = vmatprep.subr.mxu0 0.0
    %356 = vmatpush1.msra.mxu0 0.0
    %357 = vmatprep.subr.mxu0 0.0
    %358 = vmatpush1.msra.mxu0 0.0
    %359 = vmatprep.subr.mxu0 0.0
    %360 = vmatpush1.msra.mxu0 0.0
    %361 = vmatprep.subr.mxu0 0.0
    %362 = vmatpush1.msra.mxu0 0.0
    %363 = vmatprep.subr.mxu0 0.0
    %364 = vmatpush1.msra.mxu0 0.0
    %365 = vmatprep.subr.mxu0 0.0
    %366 = vmatpush1.msra.mxu0 0.0
    %367 = vmatprep.subr.mxu0 0.0
    %368 = vmatpush1.msra.mxu0 0.0
    %369 = vmatprep.subr.mxu0 0.0
    %370 = vmatpush1.msra.mxu0 0.0
    %371 = vmatprep.subr.mxu0 0.0
    %372 = vmatpush1.msra.mxu0 0.0
    %373 = vmatprep.subr.mxu0 0.0
    %374 = vmatpush1.msra.mxu0 0.0
    %375 = vmatprep.subr.mxu0 0.0
    %376 = vmatpush1.msra.mxu0 0.0
    %377 = vmatprep.mubr.f32.mxu0 0.0
    %378 = vmatmul.mubr.f32.gmra.mrb[0].mxu0 %v290
    %v379 = vpop.f32.mrb[0].mxu0
    %v380 = vadd.f32 %v251, %v379
    %v381 = vpop.f32.mrb[0].mxu0
    %382 = vmatprep.mubr.f32.mxu0 0.0
    %383 = vmatmul.mubr.f32.gmra.mrb[0].mxu0 %v293
    %v384 = vpop.f32.mrb[0].mxu0
    %v385 = vadd.f32 %v256, %v384
    %v386 = vpop.f32.mrb[0].mxu0
    %387 = vmatprep.mubr.f32.mxu0 0.0
    %388 = vmatmul.mubr.f32.gmra.mrb[0].mxu0 %v296
    %v389 = vpop.f32.mrb[0].mxu0
    %v390 = vadd.f32 %v261, %v389
    %v391 = vpop.f32.mrb[0].mxu0
    %392 = vmatprep.mubr.f32.mxu0 0.0
    %393 = vmatmul.mubr.f32.gmra.mrb[0].mxu0 %v299
    %v394 = vpop.f32.mrb[0].mxu0
    %v395 = vadd.f32 %v266, %v394
    %v396 = vpop.f32.mrb[0].mxu0
    %397 = vmatprep.mubr.f32.mxu0 0.0
    %398 = vmatmul.mubr.f32.gmra.mrb[0].mxu0 %v302
    %v399 = vpop.f32.mrb[0].mxu0
    %v400 = vadd.f32 %v271, %v399
    %v401 = vpop.f32.mrb[0].mxu0
    %402 = vmatprep.mubr.f32.mxu0 0.0
    %403 = vmatmul.mubr.f32.gmra.mrb[0].mxu0 %v305
    %v404 = vpop.f32.mrb[0].mxu0
    %v405 = vadd.f32 %v276, %v404
    %v406 = vpop.f32.mrb[0].mxu0
    %407 = vmatprep.mubr.f32.mxu0 0.0
    %408 = vmatmul.mubr.f32.gmra.mrb[0].mxu0 %v308
    %v409 = vpop.f32.mrb[0].mxu0
    %v410 = vadd.f32 %v281, %v409
    %v411 = vpop.f32.mrb[0].mxu0
    %412 = vmatprep.mubr.f32.mxu0 0.0
    %413 = vmatmul.mubr.f32.gmra.mrb[0].mxu0 %v311
    %v414 = vpop.f32.mrb[0].mxu0
    %v415 = vadd.f32 %v286, %v414
    %v416 = vpop.f32.mrb[0].mxu0
    %417 = vdwg.mxu0
    %v418 = vmax.f32 %v380, 0.0
    %v419 = vmax.f32 %v385, 0.0
    %v420 = vmax.f32 %v390, 0.0
    %v421 = vmax.f32 %v395, 0.0
    %v422 = vmax.f32 %v400, 0.0
    %v423 = vmax.f32 %v405, 0.0
    %v424 = vmax.f32 %v410, 0.0
    %v425 = vmax.f32 %v415, 0.0
    %v426 = vld [vmem:[%s5] sm:$0xff]
    %v427 = vld [vmem:[%s5 + $0x8] sm:$0xff]
    %v428 = vld [vmem:[%s5 + $0x10] sm:$0xff]
    %v429 = vld [vmem:[%s5 + $0x18] sm:$0xff]
    %v430 = vld [vmem:[%s5 + $0x20] sm:$0xff]
    %v431 = vld [vmem:[%s5 + $0x28] sm:$0xff]
    %v432 = vld [vmem:[%s5 + $0x30] sm:$0xff]
    %v433 = vld [vmem:[%s5 + $0x38] sm:$0xff]
    %v434 = vld [vmem:[%s6] sm:$0xff]
    %v435 = vld [vmem:[%s6 + $0x8] sm:$0xff]
    %v436 = vld [vmem:[%s6 + $0x10] sm:$0xff]
    %v437 = vld [vmem:[%s6 + $0x18] sm:$0xff]
    %v438 = vld [vmem:[%s6 + $0x20] sm:$0xff]
    %v439 = vld [vmem:[%s6 + $0x28] sm:$0xff]
    %v440 = vld [vmem:[%s6 + $0x30] sm:$0xff]
    %v441 = vld [vmem:[%s6 + $0x38] sm:$0xff]
    %443 = vset.pattern.permute.xlu0 0
    %444 = vperm.xlu0 %443, %v434
    %v445 = vpop.permute.xlu0 %444
    %448 = vset.pattern.permute.xlu0 0
    %449 = vperm.xlu0 %448, %v435
    %v450 = vpop.permute.xlu0 %449
    %453 = vset.pattern.permute.xlu0 0
    %454 = vperm.xlu0 %453, %v436
    %v455 = vpop.permute.xlu0 %454
    %458 = vset.pattern.permute.xlu0 0
    %459 = vperm.xlu0 %458, %v437
    %v460 = vpop.permute.xlu0 %459
    %463 = vset.pattern.permute.xlu0 0
    %464 = vperm.xlu0 %463, %v438
    %v465 = vpop.permute.xlu0 %464
    %468 = vset.pattern.permute.xlu0 0
    %469 = vperm.xlu0 %468, %v439
    %v470 = vpop.permute.xlu0 %469
    %473 = vset.pattern.permute.xlu0 0
    %474 = vperm.xlu0 %473, %v440
    %v475 = vpop.permute.xlu0 %474
    %478 = vset.pattern.permute.xlu0 0
    %479 = vperm.xlu0 %478, %v441
    %v480 = vpop.permute.xlu0 %479
    %v483 = vsel %vm288, %v426, 0
    %v486 = vsel %vm288, %v427, 0
    %v489 = vsel %vm288, %v428, 0
    %v492 = vsel %vm288, %v429, 0
    %v495 = vsel %vm288, %v430, 0
    %v498 = vsel %vm288, %v431, 0
    %v501 = vsel %vm288, %v432, 0
    %v504 = vsel %vm288, %v433, 0
    %506 = vmatprep.subr.mxu0 0.0
    %507 = vmatpush1.msra.mxu0 %v418
    %508 = vmatprep.subr.mxu0 0.0
    %509 = vmatpush1.msra.mxu0 %v419
    %510 = vmatprep.subr.mxu0 0.0
    %511 = vmatpush1.msra.mxu0 %v420
    %512 = vmatprep.subr.mxu0 0.0
    %513 = vmatpush1.msra.mxu0 %v421
    %514 = vmatprep.subr.mxu0 0.0
    %515 = vmatpush1.msra.mxu0 %v422
    %516 = vmatprep.subr.mxu0 0.0
    %517 = vmatpush1.msra.mxu0 %v423
    %518 = vmatprep.subr.mxu0 0.0
    %519 = vmatpush1.msra.mxu0 %v424
    %520 = vmatprep.subr.mxu0 0.0
    %521 = vmatpush1.msra.mxu0 %v425
    %522 = vmatprep.subr.mxu0 0.0
    %523 = vmatpush1.msra.mxu0 0.0
    %524 = vmatprep.subr.mxu0 0.0
    %525 = vmatpush1.msra.mxu0 0.0
    %526 = vmatprep.subr.mxu0 0.0
    %527 = vmatpush1.msra.mxu0 0.0
    %528 = vmatprep.subr.mxu0 0.0
    %529 = vmatpush1.msra.mxu0 0.0
    %530 = vmatprep.subr.mxu0 0.0
    %531 = vmatpush1.msra.mxu0 0.0
    %532 = vmatprep.subr.mxu0 0.0
    %533 = vmatpush1.msra.mxu0 0.0
    %534 = vmatprep.subr.mxu0 0.0
    %535 = vmatpush1.msra.mxu0 0.0
    %536 = vmatprep.subr.mxu0 0.0
    %537 = vmatpush1.msra.mxu0 0.0
    %538 = vmatprep.subr.mxu0 0.0
    %539 = vmatpush1.msra.mxu0 0.0
    %540 = vmatprep.subr.mxu0 0.0
    %541 = vmatpush1.msra.mxu0 0.0
    %542 = vmatprep.subr.mxu0 0.0
    %543 = vmatpush1.msra.mxu0 0.0
    %544 = vmatprep.subr.mxu0 0.0
    %545 = vmatpush1.msra.mxu0 0.0
    %546 = vmatprep.subr.mxu0 0.0
    %547 = vmatpush1.msra.mxu0 0.0
    %548 = vmatprep.subr.mxu0 0.0
    %549 = vmatpush1.msra.mxu0 0.0
    %550 = vmatprep.subr.mxu0 0.0
    %551 = vmatpush1.msra.mxu0 0.0
    %552 = vmatprep.subr.mxu0 0.0
    %553 = vmatpush1.msra.mxu0 0.0
    %554 = vmatprep.subr.mxu0 0.0
    %555 = vmatpush1.msra.mxu0 0.0
    %556 = vmatprep.subr.mxu0 0.0
    %557 = vmatpush1.msra.mxu0 0.0
    %558 = vmatprep.subr.mxu0 0.0
    %559 = vmatpush1.msra.mxu0 0.0
    %560 = vmatprep.subr.mxu0 0.0
    %561 = vmatpush1.msra.mxu0 0.0
    %562 = vmatprep.subr.mxu0 0.0
    %563 = vmatpush1.msra.mxu0 0.0
    %564 = vmatprep.subr.mxu0 0.0
    %565 = vmatpush1.msra.mxu0 0.0
    %566 = vmatprep.subr.mxu0 0.0
    %567 = vmatpush1.msra.mxu0 0.0
    %568 = vmatprep.subr.mxu0 0.0
    %569 = vmatpush1.msra.mxu0 0.0
    %570 = vmatprep.mubr.f32.mxu0 0.0
    %571 = vmatmul.mubr.f32.gmra.mrb[0].mxu0 %v483
    %v572 = vpop.f32.mrb[0].mxu0
    %v573 = vadd.f32 %v445, %v572
    %v574 = vpop.f32.mrb[0].mxu0
    %575 = vmatprep.mubr.f32.mxu0 0.0
    %576 = vmatmul.mubr.f32.gmra.mrb[0].mxu0 %v486
    %v577 = vpop.f32.mrb[0].mxu0
    %v578 = vadd.f32 %v450, %v577
    %v579 = vpop.f32.mrb[0].mxu0
    %580 = vmatprep.mubr.f32.mxu0 0.0
    %581 = vmatmul.mubr.f32.gmra.mrb[0].mxu0 %v489
    %v582 = vpop.f32.mrb[0].mxu0
    %v583 = vadd.f32 %v455, %v582
    %v584 = vpop.f32.mrb[0].mxu0
    %585 = vmatprep.mubr.f32.mxu0 0.0
    %586 = vmatmul.mubr.f32.gmra.mrb[0].mxu0 %v492
    %v587 = vpop.f32.mrb[0].mxu0
    %v588 = vadd.f32 %v460, %v587
    %v589 = vpop.f32.mrb[0].mxu0
    %590 = vmatprep.mubr.f32.mxu0 0.0
    %591 = vmatmul.mubr.f32.gmra.mrb[0].mxu0 %v495
    %v592 = vpop.f32.mrb[0].mxu0
    %v593 = vadd.f32 %v465, %v592
    %v594 = vpop.f32.mrb[0].mxu0
    %595 = vmatprep.mubr.f32.mxu0 0.0
    %596 = vmatmul.mubr.f32.gmra.mrb[0].mxu0 %v498
    %v597 = vpop.f32.mrb[0].mxu0
    %v598 = vadd.f32 %v470, %v597
    %v599 = vpop.f32.mrb[0].mxu0
    %600 = vmatprep.mubr.f32.mxu0 0.0
    %601 = vmatmul.mubr.f32.gmra.mrb[0].mxu0 %v501
    %v602 = vpop.f32.mrb[0].mxu0
    %v603 = vadd.f32 %v475, %v602
    %v604 = vpop.f32.mrb[0].mxu0
    %605 = vmatprep.mubr.f32.mxu0 0.0
    %606 = vmatmul.mubr.f32.gmra.mrb[0].mxu0 %v504
    %v607 = vpop.f32.mrb[0].mxu0
    %v608 = vadd.f32 %v480, %v607
    %v609 = vpop.f32.mrb[0].mxu0
    %610 = vdwg.mxu0
    %v611 = vmax.f32 %v573, 0.0
    %v612 = vmax.f32 %v578, 0.0
    %v613 = vmax.f32 %v583, 0.0
    %v614 = vmax.f32 %v588, 0.0
    %v615 = vmax.f32 %v593, 0.0
    %v616 = vmax.f32 %v598, 0.0
    %v617 = vmax.f32 %v603, 0.0
    %v618 = vmax.f32 %v608, 0.0
    %v619 = vld [vmem:[%s7] sm:$0x3]
    %v620 = vld [vmem:[%s8] sm:$0x3]
    %622 = vset.pattern.permute.xlu0 0
    %623 = vperm.xlu0 %622, %v620
    %v624 = vpop.permute.xlu0 %623
    %v627 = vsel %vm288, %v619, 0
    %629 = vmatprep.subr.mxu0 0.0
    %630 = vmatpush1.msra.mxu0 %v611
    %631 = vmatprep.subr.mxu0 0.0
    %632 = vmatpush1.msra.mxu0 %v612
    %633 = vmatprep.subr.mxu0 0.0
    %634 = vmatpush1.msra.mxu0 %v613
    %635 = vmatprep.subr.mxu0 0.0
    %636 = vmatpush1.msra.mxu0 %v614
    %637 = vmatprep.subr.mxu0 0.0
    %638 = vmatpush1.msra.mxu0 %v615
    %639 = vmatprep.subr.mxu0 0.0
    %640 = vmatpush1.msra.mxu0 %v616
    %641 = vmatprep.subr.mxu0 0.0
    %642 = vmatpush1.msra.mxu0 %v617
    %643 = vmatprep.subr.mxu0 0.0
    %644 = vmatpush1.msra.mxu0 %v618
    %645 = vmatprep.subr.mxu0 0.0
    %646 = vmatpush1.msra.mxu0 0.0
    %647 = vmatprep.subr.mxu0 0.0
    %648 = vmatpush1.msra.mxu0 0.0
    %649 = vmatprep.subr.mxu0 0.0
    %650 = vmatpush1.msra.mxu0 0.0
    %651 = vmatprep.subr.mxu0 0.0
    %652 = vmatpush1.msra.mxu0 0.0
    %653 = vmatprep.subr.mxu0 0.0
    %654 = vmatpush1.msra.mxu0 0.0
    %655 = vmatprep.subr.mxu0 0.0
    %656 = vmatpush1.msra.mxu0 0.0
    %657 = vmatprep.subr.mxu0 0.0
    %658 = vmatpush1.msra.mxu0 0.0
    %659 = vmatprep.subr.mxu0 0.0
    %660 = vmatpush1.msra.mxu0 0.0
    %661 = vmatprep.subr.mxu0 0.0
    %662 = vmatpush1.msra.mxu0 0.0
    %663 = vmatprep.subr.mxu0 0.0
    %664 = vmatpush1.msra.mxu0 0.0
    %665 = vmatprep.subr.mxu0 0.0
    %666 = vmatpush1.msra.mxu0 0.0
    %667 = vmatprep.subr.mxu0 0.0
    %668 = vmatpush1.msra.mxu0 0.0
    %669 = vmatprep.subr.mxu0 0.0
    %670 = vmatpush1.msra.mxu0 0.0
    %671 = vmatprep.subr.mxu0 0.0
    %672 = vmatpush1.msra.mxu0 0.0
    %673 = vmatprep.subr.mxu0 0.0
    %674 = vmatpush1.msra.mxu0 0.0
    %675 = vmatprep.subr.mxu0 0.0
    %676 = vmatpush1.msra.mxu0 0.0
    %677 = vmatprep.subr.mxu0 0.0
    %678 = vmatpush1.msra.mxu0 0.0
    %679 = vmatprep.subr.mxu0 0.0
    %680 = vmatpush1.msra.mxu0 0.0
    %681 = vmatprep.subr.mxu0 0.0
    %682 = vmatpush1.msra.mxu0 0.0
    %683 = vmatprep.subr.mxu0 0.0
    %684 = vmatpush1.msra.mxu0 0.0
    %685 = vmatprep.subr.mxu0 0.0
    %686 = vmatpush1.msra.mxu0 0.0
    %687 = vmatprep.subr.mxu0 0.0
    %688 = vmatpush1.msra.mxu0 0.0
    %689 = vmatprep.subr.mxu0 0.0
    %690 = vmatpush1.msra.mxu0 0.0
    %691 = vmatprep.subr.mxu0 0.0
    %692 = vmatpush1.msra.mxu0 0.0
    %693 = vmatprep.mubr.f32.mxu0 0.0
    %694 = vmatmul.mubr.f32.gmra.mrb[0].mxu0 %v627
    %v695 = vpop.f32.mrb[0].mxu0
    %v696 = vadd.f32 %v624, %v695
    %v697 = vpop.f32.mrb[0].mxu0
    %698 = vdwg.mxu0
    %699 = vst [vmem:[#allocation2] sm:$0x3] %v696
    // Predicated region
    $region38: #{dqn_forward.1} parent=1 // pred_check
      _
    $region39: #{dqn_forward.1} parent=1 // pred_check_branch
      %701 = sbr.rel (0) target = $region41
    $region40: #{dqn_forward.1} parent=1 // pred_region
      %s703 = ssub.s32 32, 32
      %704 = vsyncadd [#allocation3], %s703
      %s706 = sshll.u32 [#allocation2], 4
      %s707 = int_to_ptr.vmem [resolvable:$true] %s706
      %709 = dma.vmem_to_hbm [thread:$0]  %s707, 32, %s9, [#allocation3]
    $region41: #{dqn_forward.1} parent=1 // pred_fallthru
      _
    // Predicated region
    $region42: #{dqn_forward.1} parent=1 // pred_check
      _
    $region43: #{dqn_forward.1} parent=1 // pred_check_branch
      %711 = sbr.rel (0) target = $region45
    $region44: #{dqn_forward.1} parent=1 // pred_region
      %712 = dma.done [#allocation3], 32
    $region45: #{dqn_forward.1} parent=1 // pred_fallthru
      _
    %713 = vsyncpa [#allocation3], 1

</llo_original>
